<compile_context>
chip_gen: v7x
topology: tpu7x:2x2x1
jax: 0.10.0
libtpu: 0.0.40
codegen_flags: <defaults>
</compile_context>

<pallas_src>
import jax
import jax.numpy as jnp
from jax.experimental import pallas as pl
from jax.experimental.pallas import tpu as pltpu

_LANE = 128          # vreg lane width
_SUBLANE = 8         # vreg sublane width
_MAX_TILE_B = 512    # batch rows per grid step
_COMPUTE_DTYPE = jnp.bfloat16


def _round_up(x, m):
    return (x + m - 1) // m * m


def _pad2d(a, rows, cols):
    return jnp.pad(a, ((0, rows - a.shape[0]), (0, cols - a.shape[1])))


def _dqn_kernel(x_ref, w1_ref, b1_ref, w2_ref, b2_ref, w3_ref, b3_ref, o_ref):
    """One batch block: (TILE_B, S) @ W1 -> ReLU -> @ W2 -> ReLU -> @ W3."""
    x = x_ref[...]                       # (TILE_B, S_pad) bf16
    b1 = b1_ref[...]                     # (1, H_pad) f32, resident in VMEM
    b2 = b2_ref[...]
    b3 = b3_ref[...]

    h1 = jnp.dot(x, w1_ref[...], preferred_element_type=jnp.float32) + b1
    h1 = jnp.maximum(h1, 0.0).astype(w2_ref.dtype)          # bf16 back onto MXU

    h2 = jnp.dot(h1, w2_ref[...], preferred_element_type=jnp.float32) + b2
    h2 = jnp.maximum(h2, 0.0).astype(w3_ref.dtype)

    q = jnp.dot(h2, w3_ref[...], preferred_element_type=jnp.float32) + b3
    o_ref[...] = q.astype(o_ref.dtype)


@jax.jit
def dq_network_forward(x, params):
    """Pallas forward for DQNetwork.

    Args:
      x: (batch, state_dim) float32 states.
      params: dict with w1 (S,H), b1 (1,H), w2 (H,H), b2 (1,H),
              w3 (H,A), b3 (1,A)  (weights stored as PyTorch weight.T).
    Returns:
      (batch, action_dim) float32 Q-values.
    """
    batch, state_dim = x.shape
    hidden_dim = params["w1"].shape[1]
    action_dim = params["w3"].shape[1]

    # Lane-pad every feature dim; sublane / tile-pad the batch.
    s_pad = _round_up(state_dim, _LANE)
    h_pad = _round_up(hidden_dim, _LANE)
    a_pad = _round_up(action_dim, _LANE)
    tile_b = _MAX_TILE_B if batch >= _MAX_TILE_B else _round_up(batch, _SUBLANE)
    b_pad = _round_up(batch, tile_b)

    x_p = _pad2d(x, b_pad, s_pad).astype(_COMPUTE_DTYPE)
    w1 = _pad2d(params["w1"], s_pad, h_pad).astype(_COMPUTE_DTYPE)
    w2 = _pad2d(params["w2"], h_pad, h_pad).astype(_COMPUTE_DTYPE)
    w3 = _pad2d(params["w3"], h_pad, a_pad).astype(_COMPUTE_DTYPE)
    b1 = _pad2d(params["b1"].astype(jnp.float32), 1, h_pad)
    b2 = _pad2d(params["b2"].astype(jnp.float32), 1, h_pad)
    b3 = _pad2d(params["b3"].astype(jnp.float32), 1, a_pad)

    grid = (b_pad // tile_b,)
    resident = lambda shape: pl.BlockSpec(shape, lambda i: (0, 0))  # stays in VMEM

    q_pad = pl.pallas_call(
        _dqn_kernel,
        out_shape=jax.ShapeDtypeStruct((b_pad, a_pad), jnp.float32),
        grid=grid,
        in_specs=[
            pl.BlockSpec((tile_b, s_pad), lambda i: (i, 0)),   # pipelined x blocks
            resident(w1.shape), resident(b1.shape),
            resident(w2.shape), resident(b2.shape),
            resident(w3.shape), resident(b3.shape),
        ],
        out_specs=pl.BlockSpec((tile_b, a_pad), lambda i: (i, 0)),
        compiler_params=pltpu.CompilerParams(
            dimension_semantics=("parallel",),      # megacore-shard the batch axis
            vmem_limit_bytes=64 * 1024 * 1024,
        ),
    )(x_p, w1, b1, w2, b2, w3, b3)

    return q_pad[:batch, :action_dim]


def init_dqn_params(key, state_dim, action_dim, hidden_dim=64, dtype=jnp.float32):
    """Mimics PyTorch nn.Linear default init (U[-1/sqrt(fan_in), +1/sqrt(fan_in)])."""
    def linear(k, fan_in, fan_out):
        kw, kb = jax.random.split(k)
        bound = 1.0 / jnp.sqrt(fan_in)
        w = jax.random.uniform(kw, (fan_in, fan_out), dtype, -bound, bound)
        b = jax.random.uniform(kb, (1, fan_out), dtype, -bound, bound)
        return w, b

    k1, k2, k3 = jax.random.split(key, 3)
    w1, b1 = linear(k1, state_dim, hidden_dim)
    w2, b2 = linear(k2, hidden_dim, hidden_dim)
    w3, b3 = linear(k3, hidden_dim, action_dim)
    return {"w1": w1, "b1": b1, "w2": w2, "b2": b2, "w3": w3, "b3": b3}


def _reference_forward_f32(x, p):
    h1 = jnp.maximum(x @ p["w1"] + p["b1"], 0.0)
    h2 = jnp.maximum(h1 @ p["w2"] + p["b2"], 0.0)
    return h2 @ p["w3"] + p["b3"]


def _reference_forward_bf16(x, p):
    cd = _COMPUTE_DTYPE
    h1 = jnp.dot(x.astype(cd), p["w1"].astype(cd),
                 preferred_element_type=jnp.float32) + p["b1"]
    h1 = jnp.maximum(h1, 0.0).astype(cd)
    h2 = jnp.dot(h1, p["w2"].astype(cd),
                 preferred_element_type=jnp.float32) + p["b2"]
    h2 = jnp.maximum(h2, 0.0).astype(cd)
    return jnp.dot(h2, p["w3"].astype(cd),
                   preferred_element_type=jnp.float32) + p["b3"]


if __name__ == "__main__":
    # Shapes implied by the module: state_dim=16, hidden_dim=64 (default),
    # action_dim=8.  Small acting batch plus a larger batch to exercise tiling.
    state_dim, hidden_dim, action_dim = 16, 64, 8

    key = jax.random.PRNGKey(0)
    kx1, kx2, kp = jax.random.split(key, 3)
    params = init_dqn_params(kp, state_dim, action_dim, hidden_dim)

    ok = True
    for kx, batch in ((kx1, 2), (kx2, 600)):
        x = jax.random.normal(kx, (batch, state_dim), jnp.float32)

        q = jax.block_until_ready(dq_network_forward(x, params))
        assert q.shape == (batch, action_dim)

        # Match bf16-compute / f32-accumulate reference tightly ...
        ref_bf16 = _reference_forward_bf16(x, params)
        ok &= bool(jnp.allclose(q, ref_bf16, atol=1e-3, rtol=1e-3))
        # ... and stay within bf16-level error of the pure-f32 PyTorch semantics.
        ref_f32 = _reference_forward_f32(x, params)
        ok &= bool(jnp.allclose(q, ref_f32, atol=5e-2, rtol=5e-2))

    assert ok, "mismatch vs reference"
    print("KERNEL_OK")
</pallas_src>

<mosaic_0001>
module attributes {stable_mosaic.version = 11 : i64} {
  func.func @_dqn_kernel(%arg0: i32, %arg1: memref<8x128xbf16, #tpu.memory_space<vmem>>, %arg2: memref<128x128xbf16, #tpu.memory_space<vmem>>, %arg3: memref<1x128xf32, #tpu.memory_space<vmem>>, %arg4: memref<128x128xbf16, #tpu.memory_space<vmem>>, %arg5: memref<1x128xf32, #tpu.memory_space<vmem>>, %arg6: memref<128x128xbf16, #tpu.memory_space<vmem>>, %arg7: memref<1x128xf32, #tpu.memory_space<vmem>>, %arg8: memref<8x128xf32, #tpu.memory_space<vmem>>) attributes {dimension_semantics = [#tpu.dimension_semantics<parallel>], iteration_bounds = array<i64: 1>, scalar_prefetch = 0 : i64, scratch_operands = 0 : i64, tpu.core_type = #tpu.core_type<tc>, window_params = [{transform_indices = @transform_0, window_bounds = array<i64: 8, 128>}, {pipeline_mode = #tpu.pipeline_mode<synchronous>, transform_indices = @transform_1, window_bounds = array<i64: 128, 128>}, {pipeline_mode = #tpu.pipeline_mode<synchronous>, transform_indices = @transform_2, window_bounds = array<i64: 1, 128>}, {pipeline_mode = #tpu.pipeline_mode<synchronous>, transform_indices = @transform_3, window_bounds = array<i64: 128, 128>}, {pipeline_mode = #tpu.pipeline_mode<synchronous>, transform_indices = @transform_4, window_bounds = array<i64: 1, 128>}, {pipeline_mode = #tpu.pipeline_mode<synchronous>, transform_indices = @transform_5, window_bounds = array<i64: 128, 128>}, {pipeline_mode = #tpu.pipeline_mode<synchronous>, transform_indices = @transform_6, window_bounds = array<i64: 1, 128>}, {transform_indices = @transform_7, window_bounds = array<i64: 8, 128>}]} {
    %c0 = arith.constant 0 : index
    %c0_0 = arith.constant 0 : index
    %0 = vector.load %arg1[%c0, %c0_0] : memref<8x128xbf16, #tpu.memory_space<vmem>>, vector<8x128xbf16>
    %c0_1 = arith.constant 0 : index
    %c0_2 = arith.constant 0 : index
    %1 = vector.load %arg3[%c0_1, %c0_2] : memref<1x128xf32, #tpu.memory_space<vmem>>, vector<1x128xf32>
    %c0_3 = arith.constant 0 : index
    %c0_4 = arith.constant 0 : index
    %2 = vector.load %arg5[%c0_3, %c0_4] : memref<1x128xf32, #tpu.memory_space<vmem>>, vector<1x128xf32>
    %c0_5 = arith.constant 0 : index
    %c0_6 = arith.constant 0 : index
    %3 = vector.load %arg7[%c0_5, %c0_6] : memref<1x128xf32, #tpu.memory_space<vmem>>, vector<1x128xf32>
    %c0_7 = arith.constant 0 : index
    %c0_8 = arith.constant 0 : index
    %4 = vector.load %arg2[%c0_7, %c0_8] : memref<128x128xbf16, #tpu.memory_space<vmem>>, vector<128x128xbf16>
    %cst = arith.constant dense<0.000000e+00> : vector<8x128xf32>
    %5 = tpu.matmul %0, %4, %cst {dimension_numbers = #tpu.dot_dimension_numbers<[1], [0], [0], [1], [0, 0, 1, 1], [], []>} : vector<8x128xbf16>, vector<128x128xbf16>, vector<8x128xf32> -> vector<8x128xf32>
    %6 = vector.broadcast %1 : vector<1x128xf32> to vector<8x128xf32>
    %7 = arith.addf %5, %6 : vector<8x128xf32>
    %cst_9 = arith.constant 0.000000e+00 : f32
    %8 = vector.broadcast %cst_9 : f32 to vector<8x128xf32>
    %9 = arith.maximumf %7, %8 : vector<8x128xf32>
    %10 = arith.truncf %9 : vector<8x128xf32> to vector<8x128xbf16>
    %c0_10 = arith.constant 0 : index
    %c0_11 = arith.constant 0 : index
    %11 = vector.load %arg4[%c0_10, %c0_11] : memref<128x128xbf16, #tpu.memory_space<vmem>>, vector<128x128xbf16>
    %cst_12 = arith.constant dense<0.000000e+00> : vector<8x128xf32>
    %12 = tpu.matmul %10, %11, %cst_12 {dimension_numbers = #tpu.dot_dimension_numbers<[1], [0], [0], [1], [0, 0, 1, 1], [], []>} : vector<8x128xbf16>, vector<128x128xbf16>, vector<8x128xf32> -> vector<8x128xf32>
    %13 = vector.broadcast %2 : vector<1x128xf32> to vector<8x128xf32>
    %14 = arith.addf %12, %13 : vector<8x128xf32>
    %cst_13 = arith.constant 0.000000e+00 : f32
    %15 = vector.broadcast %cst_13 : f32 to vector<8x128xf32>
    %16 = arith.maximumf %14, %15 : vector<8x128xf32>
    %17 = arith.truncf %16 : vector<8x128xf32> to vector<8x128xbf16>
    %c0_14 = arith.constant 0 : index
    %c0_15 = arith.constant 0 : index
    %18 = vector.load %arg6[%c0_14, %c0_15] : memref<128x128xbf16, #tpu.memory_space<vmem>>, vector<128x128xbf16>
    %cst_16 = arith.constant dense<0.000000e+00> : vector<8x128xf32>
    %19 = tpu.matmul %17, %18, %cst_16 {dimension_numbers = #tpu.dot_dimension_numbers<[1], [0], [0], [1], [0, 0, 1, 1], [], []>} : vector<8x128xbf16>, vector<128x128xbf16>, vector<8x128xf32> -> vector<8x128xf32>
    %20 = vector.broadcast %3 : vector<1x128xf32> to vector<8x128xf32>
    %21 = arith.addf %19, %20 : vector<8x128xf32>
    %c0_17 = arith.constant 0 : index
    %c0_18 = arith.constant 0 : index
    %22 = vector.load %arg8[%c0_17, %c0_18] : memref<8x128xf32, #tpu.memory_space<vmem>>, vector<8x128xf32>
    tpu.vector_store %arg8[%c0_17, %c0_18], %21 {strides = array<i32>} : memref<8x128xf32, #tpu.memory_space<vmem>>, vector<8x128xf32>,
    return
  }
  func.func @transform_0(%arg0: i32) -> (i32, i32) {
    %c0_i32 = arith.constant 0 : i32
    %c0_i32_0 = arith.constant 0 : i32
    return %arg0, %c0_i32 : i32, i32
  }
  func.func @transform_1(%arg0: i32) -> (i32, i32) {
    %c0_i32 = arith.constant 0 : i32
    %c0_i32_0 = arith.constant 0 : i32
    %c0_i32_1 = arith.constant 0 : i32
    return %c0_i32, %c0_i32_0 : i32, i32
  }
  func.func @transform_2(%arg0: i32) -> (i32, i32) {
    %c0_i32 = arith.constant 0 : i32
    %c0_i32_0 = arith.constant 0 : i32
    %c0_i32_1 = arith.constant 0 : i32
    return %c0_i32, %c0_i32_0 : i32, i32
  }
  func.func @transform_3(%arg0: i32) -> (i32, i32) {
    %c0_i32 = arith.constant 0 : i32
    %c0_i32_0 = arith.constant 0 : i32
    %c0_i32_1 = arith.constant 0 : i32
    return %c0_i32, %c0_i32_0 : i32, i32
  }
  func.func @transform_4(%arg0: i32) -> (i32, i32) {
    %c0_i32 = arith.constant 0 : i32
    %c0_i32_0 = arith.constant 0 : i32
    %c0_i32_1 = arith.constant 0 : i32
    return %c0_i32, %c0_i32_0 : i32, i32
  }
  func.func @transform_5(%arg0: i32) -> (i32, i32) {
    %c0_i32 = arith.constant 0 : i32
    %c0_i32_0 = arith.constant 0 : i32
    %c0_i32_1 = arith.constant 0 : i32
    return %c0_i32, %c0_i32_0 : i32, i32
  }
  func.func @transform_6(%arg0: i32) -> (i32, i32) {
    %c0_i32 = arith.constant 0 : i32
    %c0_i32_0 = arith.constant 0 : i32
    %c0_i32_1 = arith.constant 0 : i32
    return %c0_i32, %c0_i32_0 : i32, i32
  }
  func.func @transform_7(%arg0: i32) -> (i32, i32) {
    %c0_i32 = arith.constant 0 : i32
    %c0_i32_0 = arith.constant 0 : i32
    return %arg0, %c0_i32 : i32, i32
  }
}

</mosaic_0001>

<llo_original>
// kernel: dq_network_forward.1
$region0: #{dq_network_forward.1}
  #allocation0 [shape = 'u32[]', space=smem, size = 0x4, offset = 0x4, fixed_abs, tag = 'smem constant byte address 0x4 - core index']
  #allocation1 [shape = 'u32[144,128]{1,0:T(1,128)}', space=vmem, size = 0x12000, scoped, tag = 'internal scratch']
  %s0 = inlined_call_operand.hbm [shape: bf16[8,128], index: 0, kind: input, shape index: {}]
  %s1 = inlined_call_operand.hbm [shape: bf16[128,128], index: 1, kind: input, shape index: {}]
  %s2 = inlined_call_operand.hbm [shape: f32[1,128], index: 2, kind: input, shape index: {}]
  %s3 = inlined_call_operand.hbm [shape: bf16[128,128], index: 3, kind: input, shape index: {}]
  %s4 = inlined_call_operand.hbm [shape: f32[1,128], index: 4, kind: input, shape index: {}]
  %s5 = inlined_call_operand.hbm [shape: bf16[128,128], index: 5, kind: input, shape index: {}]
  %s6 = inlined_call_operand.hbm [shape: f32[1,128], index: 6, kind: input, shape index: {}]
  %s7 = inlined_call_operand.hbm [shape: f32[8,128], index: 7, kind: output, shape index: {}]
  %s8 = sld [smem:[#allocation0]]
  $region66: #{dq_network_forward.1} parent=0
    _
  %s10 = ssub.s32 1, %s8
  %s11 = scalar_select 0, %s10, %s8
  $region1: #{dq_network_forward.1} parent=0
    #allocation2 [shape = 'u8[2048]{0}', space=vmem, size = 0x800, scoped, tag = 'input window, operand 0, single buffered']
    #allocation3 [shape = 's32[1]{0}', space=sflag, size = 0x4, scoped, tag = 'scoped memory for dq_network_forward.1']
    #allocation4 [shape = 's32[1]{0}', space=sflag, size = 0x4, scoped, tag = 'scoped memory for dq_network_forward.1']
    #allocation5 [shape = 'u8[32768]{0}', space=vmem, size = 0x8000, scoped, tag = 'input window, operand 1, single buffered']
    #allocation6 [shape = 's32[1]{0}', space=sflag, size = 0x4, scoped, tag = 'scoped memory for dq_network_forward.1']
    #allocation7 [shape = 'u8[512]{0}', space=vmem, size = 0x400, scoped, tag = 'input window, operand 2, single buffered']
    #allocation8 [shape = 'u8[32768]{0}', space=vmem, size = 0x8000, scoped, tag = 'input window, operand 3, single buffered']
    #allocation9 [shape = 's32[1]{0}', space=sflag, size = 0x4, scoped, tag = 'scoped memory for dq_network_forward.1']
    #allocation10 [shape = 'u8[512]{0}', space=vmem, size = 0x400, scoped, tag = 'input window, operand 4, single buffered']
    #allocation11 [shape = 'u8[32768]{0}', space=vmem, size = 0x8000, scoped, tag = 'input window, operand 5, single buffered']
    #allocation12 [shape = 's32[1]{0}', space=sflag, size = 0x4, scoped, tag = 'scoped memory for dq_network_forward.1']
    #allocation13 [shape = 'u8[512]{0}', space=vmem, size = 0x400, scoped, tag = 'input window, operand 6, single buffered']
    #allocation14 [shape = 'u8[4096]{0}', space=vmem, size = 0x1000, scoped, tag = 'output window, operand 0, single buffered']
    %12 = vsyncpa [#allocation3], 0
    %13 = vsyncpa [#allocation6], 0
    %14 = vsyncpa [#allocation9], 0
    %15 = vsyncpa [#allocation12], 0
    %16 = vsyncpa [#allocation4], 0
    // Predicated region
    $region2: #{dq_network_forward.1} parent=1 // pred_check
      _
    $region3: #{dq_network_forward.1} parent=1 // pred_check_branch
      %18 = sbr.rel (0) target = $region5
    $region4: #{dq_network_forward.1} parent=1 // pred_region
      %s20 = ssub.s32 64, 64
      %21 = vsyncadd [#allocation3], %s20
      %s23 = sshll.u32 [#allocation2], 4
      %s24 = int_to_ptr.vmem [resolvable:$true] %s23
      %26 = dma.hbm_to_vmem [thread:$0]  %s0, 64, %s24, [#allocation3]
    $region5: #{dq_network_forward.1} parent=1 // pred_fallthru
      _
    // Predicated region
    $region6: #{dq_network_forward.1} parent=1 // pred_check
      _
    $region7: #{dq_network_forward.1} parent=1 // pred_check_branch
      %28 = sbr.rel (0) target = $region9
    $region8: #{dq_network_forward.1} parent=1 // pred_region
      %s30 = ssub.s32 1024, 1024
      %31 = vsyncadd [#allocation6], %s30
      %s32 = sshll.u32 [#allocation5], 4
      %s33 = int_to_ptr.vmem [resolvable:$true] %s32
      %38 = dma.hbm_to_vmem [thread:$0]  %s1, 1024, %s33, [#allocation6], 64, 64, 4
    $region9: #{dq_network_forward.1} parent=1 // pred_fallthru
      _
    // Predicated region
    $region10: #{dq_network_forward.1} parent=1 // pred_check
      _
    $region11: #{dq_network_forward.1} parent=1 // pred_check_branch
      %40 = sbr.rel (0) target = $region13
    $region12: #{dq_network_forward.1} parent=1 // pred_region
      %s42 = ssub.s32 16, 16
      %43 = vsyncadd [#allocation6], %s42
      %s45 = sshll.u32 [#allocation7], 4
      %s46 = int_to_ptr.vmem [resolvable:$true] %s45
      %48 = dma.hbm_to_vmem [thread:$0]  %s2, 16, %s46, [#allocation6]
    $region13: #{dq_network_forward.1} parent=1 // pred_fallthru
      _
    // Predicated region
    $region14: #{dq_network_forward.1} parent=1 // pred_check
      _
    $region15: #{dq_network_forward.1} parent=1 // pred_check_branch
      %50 = sbr.rel (0) target = $region17
    $region16: #{dq_network_forward.1} parent=1 // pred_region
      %s52 = ssub.s32 1024, 1024
      %53 = vsyncadd [#allocation9], %s52
      %s54 = sshll.u32 [#allocation8], 4
      %s55 = int_to_ptr.vmem [resolvable:$true] %s54
      %60 = dma.hbm_to_vmem [thread:$0]  %s3, 1024, %s55, [#allocation9], 64, 64, 4
    $region17: #{dq_network_forward.1} parent=1 // pred_fallthru
      _
    // Predicated region
    $region18: #{dq_network_forward.1} parent=1 // pred_check
      _
    $region19: #{dq_network_forward.1} parent=1 // pred_check_branch
      %62 = sbr.rel (0) target = $region21
    $region20: #{dq_network_forward.1} parent=1 // pred_region
      %s64 = ssub.s32 16, 16
      %65 = vsyncadd [#allocation9], %s64
      %s67 = sshll.u32 [#allocation10], 4
      %s68 = int_to_ptr.vmem [resolvable:$true] %s67
      %70 = dma.hbm_to_vmem [thread:$0]  %s4, 16, %s68, [#allocation9]
    $region21: #{dq_network_forward.1} parent=1 // pred_fallthru
      _
    // Predicated region
    $region22: #{dq_network_forward.1} parent=1 // pred_check
      _
    $region23: #{dq_network_forward.1} parent=1 // pred_check_branch
      %72 = sbr.rel (0) target = $region25
    $region24: #{dq_network_forward.1} parent=1 // pred_region
      %s74 = ssub.s32 1024, 1024
      %75 = vsyncadd [#allocation12], %s74
      %s76 = sshll.u32 [#allocation11], 4
      %s77 = int_to_ptr.vmem [resolvable:$true] %s76
      %82 = dma.hbm_to_vmem [thread:$0]  %s5, 1024, %s77, [#allocation12], 64, 64, 4
    $region25: #{dq_network_forward.1} parent=1 // pred_fallthru
      _
    // Predicated region
    $region26: #{dq_network_forward.1} parent=1 // pred_check
      _
    $region27: #{dq_network_forward.1} parent=1 // pred_check_branch
      %84 = sbr.rel (0) target = $region29
    $region28: #{dq_network_forward.1} parent=1 // pred_region
      %s86 = ssub.s32 16, 16
      %87 = vsyncadd [#allocation12], %s86
      %s89 = sshll.u32 [#allocation13], 4
      %s90 = int_to_ptr.vmem [resolvable:$true] %s89
      %92 = dma.hbm_to_vmem [thread:$0]  %s6, 16, %s90, [#allocation12]
    $region29: #{dq_network_forward.1} parent=1 // pred_fallthru
      _
    // Predicated region
    $region30: #{dq_network_forward.1} parent=1 // pred_check
      _
    $region31: #{dq_network_forward.1} parent=1 // pred_check_branch
      %94 = sbr.rel (0) target = $region33
    $region32: #{dq_network_forward.1} parent=1 // pred_region
      %95 = dma.done [#allocation3], 64
    $region33: #{dq_network_forward.1} parent=1 // pred_fallthru
      _
    // Predicated region
    $region34: #{dq_network_forward.1} parent=1 // pred_check
      _
    $region35: #{dq_network_forward.1} parent=1 // pred_check_branch
      %97 = sbr.rel (0) target = $region37
    $region36: #{dq_network_forward.1} parent=1 // pred_region
      %98 = dma.done [#allocation6], 1024
    $region37: #{dq_network_forward.1} parent=1 // pred_fallthru
      _
    // Predicated region
    $region38: #{dq_network_forward.1} parent=1 // pred_check
      _
    $region39: #{dq_network_forward.1} parent=1 // pred_check_branch
      %100 = sbr.rel (0) target = $region41
    $region40: #{dq_network_forward.1} parent=1 // pred_region
      %101 = dma.done [#allocation6], 16
    $region41: #{dq_network_forward.1} parent=1 // pred_fallthru
      _
    // Predicated region
    $region42: #{dq_network_forward.1} parent=1 // pred_check
      _
    $region43: #{dq_network_forward.1} parent=1 // pred_check_branch
      %103 = sbr.rel (0) target = $region45
    $region44: #{dq_network_forward.1} parent=1 // pred_region
      %104 = dma.done [#allocation9], 1024
    $region45: #{dq_network_forward.1} parent=1 // pred_fallthru
      _
    // Predicated region
    $region46: #{dq_network_forward.1} parent=1 // pred_check
      _
    $region47: #{dq_network_forward.1} parent=1 // pred_check_branch
      %106 = sbr.rel (0) target = $region49
    $region48: #{dq_network_forward.1} parent=1 // pred_region
      %107 = dma.done [#allocation9], 16
    $region49: #{dq_network_forward.1} parent=1 // pred_fallthru
      _
    // Predicated region
    $region50: #{dq_network_forward.1} parent=1 // pred_check
      _
    $region51: #{dq_network_forward.1} parent=1 // pred_check_branch
      %109 = sbr.rel (0) target = $region53
    $region52: #{dq_network_forward.1} parent=1 // pred_region
      %110 = dma.done [#allocation12], 1024
    $region53: #{dq_network_forward.1} parent=1 // pred_fallthru
      _
    // Predicated region
    $region54: #{dq_network_forward.1} parent=1 // pred_check
      _
    $region55: #{dq_network_forward.1} parent=1 // pred_check_branch
      %112 = sbr.rel (0) target = $region57
    $region56: #{dq_network_forward.1} parent=1 // pred_region
      %113 = dma.done [#allocation12], 16
    $region57: #{dq_network_forward.1} parent=1 // pred_fallthru
      _
    %v115 = vld [vmem:[#allocation2] sm:$0xf]
    %v116 = vld [vmem:[#allocation7] sm:$0x1]
    %v117 = vld [vmem:[#allocation10] sm:$0x1]
    %v118 = vld [vmem:[#allocation13] sm:$0x1]
    %v119 = vld [vmem:[#allocation5] sm:$0xf]
    %v120 = vld [vmem:[#allocation5 + $0x4] sm:$0xf]
    %v121 = vld [vmem:[#allocation5 + $0x8] sm:$0xf]
    %v122 = vld [vmem:[#allocation5 + $0xc] sm:$0xf]
    %v123 = vld [vmem:[#allocation5 + $0x10] sm:$0xf]
    %v124 = vld [vmem:[#allocation5 + $0x14] sm:$0xf]
    %v125 = vld [vmem:[#allocation5 + $0x18] sm:$0xf]
    %v126 = vld [vmem:[#allocation5 + $0x1c] sm:$0xf]
    %v127 = vld [vmem:[#allocation5 + $0x20] sm:$0xf]
    %v128 = vld [vmem:[#allocation5 + $0x24] sm:$0xf]
    %v129 = vld [vmem:[#allocation5 + $0x28] sm:$0xf]
    %v130 = vld [vmem:[#allocation5 + $0x2c] sm:$0xf]
    %v131 = vld [vmem:[#allocation5 + $0x30] sm:$0xf]
    %v132 = vld [vmem:[#allocation5 + $0x34] sm:$0xf]
    %v133 = vld [vmem:[#allocation5 + $0x38] sm:$0xf]
    %v134 = vld [vmem:[#allocation5 + $0x3c] sm:$0xf]
    %v136 = vlaneseq
    %v137 = vshrl.u32 %v136, 7
    %v138 = vsub.s32 0, %v137
    %v139 = vrot.slane %v116, %v138
    %v157 = vunpack.c.l.b16 %v119
    %v158 = vunpack.c.l.b16 %v120
    %v159 = vunpack.c.l.b16 %v121
    %v160 = vunpack.c.l.b16 %v122
    %v161 = vunpack.c.l.b16 %v123
    %v162 = vunpack.c.l.b16 %v124
    %v163 = vunpack.c.l.b16 %v125
    %v164 = vunpack.c.l.b16 %v126
    %v165 = vunpack.c.l.b16 %v127
    %v166 = vunpack.c.l.b16 %v128
    %v167 = vunpack.c.l.b16 %v129
    %v168 = vunpack.c.l.b16 %v130
    %v169 = vunpack.c.l.b16 %v131
    %v170 = vunpack.c.l.b16 %v132
    %v171 = vunpack.c.l.b16 %v133
    %v172 = vunpack.c.l.b16 %v134
    %v173 = vpack.c.b16 %v158, %v157
    %v174 = vpack.c.b16 %v160, %v159
    %v175 = vpack.c.b16 %v162, %v161
    %v176 = vpack.c.b16 %v164, %v163
    %v177 = vpack.c.b16 %v166, %v165
    %v178 = vpack.c.b16 %v168, %v167
    %v179 = vpack.c.b16 %v170, %v169
    %v180 = vpack.c.b16 %v172, %v171
    %189 = vmatprep.subr.bf16.mxu0 0
    %190 = vmatpush1.bf16.msra.mxu0 %v173
    %191 = vmatprep.subr.bf16.mxu0 0
    %192 = vmatpush1.bf16.msra.mxu0 %v174
    %193 = vmatprep.subr.bf16.mxu0 0
    %194 = vmatpush1.bf16.msra.mxu0 %v175
    %195 = vmatprep.subr.bf16.mxu0 0
    %196 = vmatpush1.bf16.msra.mxu0 %v176
    %197 = vmatprep.subr.bf16.mxu0 0
    %198 = vmatpush1.bf16.msra.mxu0 %v177
    %199 = vmatprep.subr.bf16.mxu0 0
    %200 = vmatpush1.bf16.msra.mxu0 %v178
    %201 = vmatprep.subr.bf16.mxu0 0
    %202 = vmatpush1.bf16.msra.mxu0 %v179
    %203 = vmatprep.subr.bf16.mxu0 0
    %204 = vmatpush1.bf16.msra.mxu0 %v180
    %205 = vmatprep.subr.bf16.mxu0 0
    %206 = vmatpush1.bf16.msra.mxu0 0
    %207 = vmatprep.subr.bf16.mxu0 0
    %208 = vmatpush1.bf16.msra.mxu0 0
    %209 = vmatprep.subr.bf16.mxu0 0
    %210 = vmatpush1.bf16.msra.mxu0 0
    %211 = vmatprep.subr.bf16.mxu0 0
    %212 = vmatpush1.bf16.msra.mxu0 0
    %213 = vmatprep.subr.bf16.mxu0 0
    %214 = vmatpush1.bf16.msra.mxu0 0
    %215 = vmatprep.subr.bf16.mxu0 0
    %216 = vmatpush1.bf16.msra.mxu0 0
    %217 = vmatprep.subr.bf16.mxu0 0
    %218 = vmatpush1.bf16.msra.mxu0 0
    %219 = vmatprep.subr.bf16.mxu0 0
    %220 = vmatpush1.bf16.msra.mxu0 0
    %221 = vmatprep.mubr.bf16.mxu0 0
    %222 = vmatmul.mubr.bf16.gmra.mrb[0].mxu0 %v115
    %v223 = vpop.f32.mrb[0].mxu0
    %v224 = vadd.f32 %v139, %v223
    %v225 = vpop.f32.mrb[0].mxu0
    %v226 = vpop.f32.mrb[0].mxu0
    %v227 = vpop.f32.mrb[0].mxu0
    %228 = vdwg.mxu0
    %v229 = vmax.f32 %v224, 0.0
    %v230 = vpack.c.bf16 %v229, %v229
    %v231 = vld [vmem:[#allocation8] sm:$0xf]
    %v232 = vld [vmem:[#allocation8 + $0x4] sm:$0xf]
    %v233 = vld [vmem:[#allocation8 + $0x8] sm:$0xf]
    %v234 = vld [vmem:[#allocation8 + $0xc] sm:$0xf]
    %v235 = vld [vmem:[#allocation8 + $0x10] sm:$0xf]
    %v236 = vld [vmem:[#allocation8 + $0x14] sm:$0xf]
    %v237 = vld [vmem:[#allocation8 + $0x18] sm:$0xf]
    %v238 = vld [vmem:[#allocation8 + $0x1c] sm:$0xf]
    %v239 = vld [vmem:[#allocation8 + $0x20] sm:$0xf]
    %v240 = vld [vmem:[#allocation8 + $0x24] sm:$0xf]
    %v241 = vld [vmem:[#allocation8 + $0x28] sm:$0xf]
    %v242 = vld [vmem:[#allocation8 + $0x2c] sm:$0xf]
    %v243 = vld [vmem:[#allocation8 + $0x30] sm:$0xf]
    %v244 = vld [vmem:[#allocation8 + $0x34] sm:$0xf]
    %v245 = vld [vmem:[#allocation8 + $0x38] sm:$0xf]
    %v246 = vld [vmem:[#allocation8 + $0x3c] sm:$0xf]
    %v248 = vlaneseq
    %v249 = vshrl.u32 %v248, 7
    %v250 = vsub.s32 0, %v249
    %v251 = vrot.slane %v117, %v250
    %v269 = vunpack.c.l.b16 %v231
    %v270 = vunpack.c.l.b16 %v232
    %v271 = vunpack.c.l.b16 %v233
    %v272 = vunpack.c.l.b16 %v234
    %v273 = vunpack.c.l.b16 %v235
    %v274 = vunpack.c.l.b16 %v236
    %v275 = vunpack.c.l.b16 %v237
    %v276 = vunpack.c.l.b16 %v238
    %v277 = vunpack.c.l.b16 %v239
    %v278 = vunpack.c.l.b16 %v240
    %v279 = vunpack.c.l.b16 %v241
    %v280 = vunpack.c.l.b16 %v242
    %v281 = vunpack.c.l.b16 %v243
    %v282 = vunpack.c.l.b16 %v244
    %v283 = vunpack.c.l.b16 %v245
    %v284 = vunpack.c.l.b16 %v246
    %v285 = vpack.c.b16 %v270, %v269
    %v286 = vpack.c.b16 %v272, %v271
    %v287 = vpack.c.b16 %v274, %v273
    %v288 = vpack.c.b16 %v276, %v275
    %v289 = vpack.c.b16 %v278, %v277
    %v290 = vpack.c.b16 %v280, %v279
    %v291 = vpack.c.b16 %v282, %v281
    %v292 = vpack.c.b16 %v284, %v283
    %301 = vmatprep.subr.bf16.mxu0 0
    %302 = vmatpush1.bf16.msra.mxu0 %v285
    %303 = vmatprep.subr.bf16.mxu0 0
    %304 = vmatpush1.bf16.msra.mxu0 %v286
    %305 = vmatprep.subr.bf16.mxu0 0
    %306 = vmatpush1.bf16.msra.mxu0 %v287
    %307 = vmatprep.subr.bf16.mxu0 0
    %308 = vmatpush1.bf16.msra.mxu0 %v288
    %309 = vmatprep.subr.bf16.mxu0 0
    %310 = vmatpush1.bf16.msra.mxu0 %v289
    %311 = vmatprep.subr.bf16.mxu0 0
    %312 = vmatpush1.bf16.msra.mxu0 %v290
    %313 = vmatprep.subr.bf16.mxu0 0
    %314 = vmatpush1.bf16.msra.mxu0 %v291
    %315 = vmatprep.subr.bf16.mxu0 0
    %316 = vmatpush1.bf16.msra.mxu0 %v292
    %317 = vmatprep.subr.bf16.mxu0 0
    %318 = vmatpush1.bf16.msra.mxu0 0
    %319 = vmatprep.subr.bf16.mxu0 0
    %320 = vmatpush1.bf16.msra.mxu0 0
    %321 = vmatprep.subr.bf16.mxu0 0
    %322 = vmatpush1.bf16.msra.mxu0 0
    %323 = vmatprep.subr.bf16.mxu0 0
    %324 = vmatpush1.bf16.msra.mxu0 0
    %325 = vmatprep.subr.bf16.mxu0 0
    %326 = vmatpush1.bf16.msra.mxu0 0
    %327 = vmatprep.subr.bf16.mxu0 0
    %328 = vmatpush1.bf16.msra.mxu0 0
    %329 = vmatprep.subr.bf16.mxu0 0
    %330 = vmatpush1.bf16.msra.mxu0 0
    %331 = vmatprep.subr.bf16.mxu0 0
    %332 = vmatpush1.bf16.msra.mxu0 0
    %333 = vmatprep.mubr.bf16.mxu0 0
    %334 = vmatmul.mubr.bf16.gmra.mrb[0].mxu0 %v230
    %v335 = vpop.f32.mrb[0].mxu0
    %v336 = vadd.f32 %v251, %v335
    %v337 = vpop.f32.mrb[0].mxu0
    %v338 = vpop.f32.mrb[0].mxu0
    %v339 = vpop.f32.mrb[0].mxu0
    %340 = vdwg.mxu0
    %v341 = vmax.f32 %v336, 0.0
    %v342 = vpack.c.bf16 %v341, %v341
    %v343 = vld [vmem:[#allocation11] sm:$0xf]
    %v344 = vld [vmem:[#allocation11 + $0x4] sm:$0xf]
    %v345 = vld [vmem:[#allocation11 + $0x8] sm:$0xf]
    %v346 = vld [vmem:[#allocation11 + $0xc] sm:$0xf]
    %v347 = vld [vmem:[#allocation11 + $0x10] sm:$0xf]
    %v348 = vld [vmem:[#allocation11 + $0x14] sm:$0xf]
    %v349 = vld [vmem:[#allocation11 + $0x18] sm:$0xf]
    %v350 = vld [vmem:[#allocation11 + $0x1c] sm:$0xf]
    %v351 = vld [vmem:[#allocation11 + $0x20] sm:$0xf]
    %v352 = vld [vmem:[#allocation11 + $0x24] sm:$0xf]
    %v353 = vld [vmem:[#allocation11 + $0x28] sm:$0xf]
    %v354 = vld [vmem:[#allocation11 + $0x2c] sm:$0xf]
    %v355 = vld [vmem:[#allocation11 + $0x30] sm:$0xf]
    %v356 = vld [vmem:[#allocation11 + $0x34] sm:$0xf]
    %v357 = vld [vmem:[#allocation11 + $0x38] sm:$0xf]
    %v358 = vld [vmem:[#allocation11 + $0x3c] sm:$0xf]
    %v360 = vlaneseq
    %v361 = vshrl.u32 %v360, 7
    %v362 = vsub.s32 0, %v361
    %v363 = vrot.slane %v118, %v362
    %v381 = vunpack.c.l.b16 %v343
    %v382 = vunpack.c.l.b16 %v344
    %v383 = vunpack.c.l.b16 %v345
    %v384 = vunpack.c.l.b16 %v346
    %v385 = vunpack.c.l.b16 %v347
    %v386 = vunpack.c.l.b16 %v348
    %v387 = vunpack.c.l.b16 %v349
    %v388 = vunpack.c.l.b16 %v350
    %v389 = vunpack.c.l.b16 %v351
    %v390 = vunpack.c.l.b16 %v352
    %v391 = vunpack.c.l.b16 %v353
    %v392 = vunpack.c.l.b16 %v354
    %v393 = vunpack.c.l.b16 %v355
    %v394 = vunpack.c.l.b16 %v356
    %v395 = vunpack.c.l.b16 %v357
    %v396 = vunpack.c.l.b16 %v358
    %v397 = vpack.c.b16 %v382, %v381
    %v398 = vpack.c.b16 %v384, %v383
    %v399 = vpack.c.b16 %v386, %v385
    %v400 = vpack.c.b16 %v388, %v387
    %v401 = vpack.c.b16 %v390, %v389
    %v402 = vpack.c.b16 %v392, %v391
    %v403 = vpack.c.b16 %v394, %v393
    %v404 = vpack.c.b16 %v396, %v395
    %413 = vmatprep.subr.bf16.mxu0 0
    %414 = vmatpush1.bf16.msra.mxu0 %v397
    %415 = vmatprep.subr.bf16.mxu0 0
    %416 = vmatpush1.bf16.msra.mxu0 %v398
    %417 = vmatprep.subr.bf16.mxu0 0
    %418 = vmatpush1.bf16.msra.mxu0 %v399
    %419 = vmatprep.subr.bf16.mxu0 0
    %420 = vmatpush1.bf16.msra.mxu0 %v400
    %421 = vmatprep.subr.bf16.mxu0 0
    %422 = vmatpush1.bf16.msra.mxu0 %v401
    %423 = vmatprep.subr.bf16.mxu0 0
    %424 = vmatpush1.bf16.msra.mxu0 %v402
    %425 = vmatprep.subr.bf16.mxu0 0
    %426 = vmatpush1.bf16.msra.mxu0 %v403
    %427 = vmatprep.subr.bf16.mxu0 0
    %428 = vmatpush1.bf16.msra.mxu0 %v404
    %429 = vmatprep.subr.bf16.mxu0 0
    %430 = vmatpush1.bf16.msra.mxu0 0
    %431 = vmatprep.subr.bf16.mxu0 0
    %432 = vmatpush1.bf16.msra.mxu0 0
    %433 = vmatprep.subr.bf16.mxu0 0
    %434 = vmatpush1.bf16.msra.mxu0 0
    %435 = vmatprep.subr.bf16.mxu0 0
    %436 = vmatpush1.bf16.msra.mxu0 0
    %437 = vmatprep.subr.bf16.mxu0 0
    %438 = vmatpush1.bf16.msra.mxu0 0
    %439 = vmatprep.subr.bf16.mxu0 0
    %440 = vmatpush1.bf16.msra.mxu0 0
    %441 = vmatprep.subr.bf16.mxu0 0
    %442 = vmatpush1.bf16.msra.mxu0 0
    %443 = vmatprep.subr.bf16.mxu0 0
    %444 = vmatpush1.bf16.msra.mxu0 0
    %445 = vmatprep.mubr.bf16.mxu0 0
    %446 = vmatmul.mubr.bf16.gmra.mrb[0].mxu0 %v342
    %v447 = vpop.f32.mrb[0].mxu0
    %v448 = vadd.f32 %v363, %v447
    %v449 = vpop.f32.mrb[0].mxu0
    %v450 = vpop.f32.mrb[0].mxu0
    %v451 = vpop.f32.mrb[0].mxu0
    %452 = vdwg.mxu0
    %453 = vst [vmem:[#allocation14] sm:$0xff] %v448
    // Predicated region
    $region58: #{dq_network_forward.1} parent=1 // pred_check
      _
    $region59: #{dq_network_forward.1} parent=1 // pred_check_branch
      %455 = sbr.rel (0) target = $region61
    $region60: #{dq_network_forward.1} parent=1 // pred_region
      %s457 = ssub.s32 128, 128
      %458 = vsyncadd [#allocation4], %s457
      %s460 = sshll.u32 [#allocation14], 4
      %s461 = int_to_ptr.vmem [resolvable:$true] %s460
      %463 = dma.vmem_to_hbm [thread:$0]  %s461, 128, %s7, [#allocation4]
    $region61: #{dq_network_forward.1} parent=1 // pred_fallthru
      _
    // Predicated region
    $region62: #{dq_network_forward.1} parent=1 // pred_check
      _
    $region63: #{dq_network_forward.1} parent=1 // pred_check_branch
      %465 = sbr.rel (0) target = $region65
    $region64: #{dq_network_forward.1} parent=1 // pred_region
      %466 = dma.done [#allocation4], 128
    $region65: #{dq_network_forward.1} parent=1 // pred_fallthru
      _
    %467 = vsyncpa [#allocation3], 1
    %468 = vsyncpa [#allocation6], 1
    %469 = vsyncpa [#allocation9], 1
    %470 = vsyncpa [#allocation12], 1
    %471 = vsyncpa [#allocation4], 1

</llo_original>
